<compile_context>
chip_gen: v7x
topology: tpu7x:2x2x1
jax: 0.10.0
libtpu: 0.0.40
codegen_flags: <defaults>
</compile_context>

<pallas_src>
import jax
import jax.numpy as jnp
from jax.experimental import pallas as pl
from jax.experimental.pallas import tpu as pltpu


def _encoder_kernel(x_ref, w1_ref, b1_ref, w2_ref, b2_ref, out_ref):
    """One batch tile of the fused MLP encoder: relu(x @ W1 + b1) @ W2 + b2."""
    x = x_ref[...]
    # MXU matmul, f32 accumulation; bias add + ReLU in f32 on the VPU.
    h = jnp.dot(x, w1_ref[...], preferred_element_type=jnp.float32)
    h = jnp.maximum(h + b1_ref[...], 0.0)
    # Back to the streamed dtype for the second MXU push (no-op in f32 mode).
    h = h.astype(w2_ref.dtype)
    z = jnp.dot(h, w2_ref[...], preferred_element_type=jnp.float32)
    out_ref[...] = (z + b2_ref[...]).astype(out_ref.dtype)


def encoder_forward(x, w1, b1, w2, b2, *, block_b=512, stream_dtype=None):
    """z = relu(x @ w1 + b1) @ w2 + b2 as a single fused, batch-tiled Pallas kernel.

    block_b:      batch tile (rows). Must be a multiple of 8. Used only when
                  B > block_b; small batches run as one full-array block.
    stream_dtype: optional dtype (e.g. jnp.bfloat16) to stream x/w1/w2 in;
                  accumulation, bias add and ReLU stay f32.
    """
    assert block_b % 8 == 0, "batch tile must be sublane-aligned (multiple of 8)"
    out_dtype = x.dtype
    B, D_in = x.shape
    H = w1.shape[1]
    L = w2.shape[1]

    if stream_dtype is not None:
        x = x.astype(stream_dtype)
        w1 = w1.astype(stream_dtype)
        w2 = w2.astype(stream_dtype)
    b1 = b1.astype(jnp.float32)
    b2 = b2.astype(jnp.float32)

    # Batch tile: large & 8-aligned when tiling, or the full (small) batch as a
    # single block (full-array block dims are exempt from the (8,128) rule).
    if B <= block_b:
        tb = B
        padded_b = B
    else:
        tb = block_b
        padded_b = pl.cdiv(B, tb) * tb
        if padded_b != B:
            x = jnp.pad(x, ((0, padded_b - B), (0, 0)))
    grid = (padded_b // tb,)

    in_item = x.dtype.itemsize
    cost = pl.CostEstimate(
        flops=2 * padded_b * (D_in * H + H * L),
        transcendentals=0,
        bytes_accessed=(x.size * in_item
                        + w1.size * in_item + w2.size * in_item
                        + b1.size * 4 + b2.size * 4
                        + padded_b * L * jnp.dtype(out_dtype).itemsize),
    )

    vmem = pltpu.MemorySpace.VMEM
    out = pl.pallas_call(
        _encoder_kernel,
        out_shape=jax.ShapeDtypeStruct((padded_b, L), out_dtype),
        grid=grid,
        in_specs=[
            # x streams in batch tiles; weights/biases stay resident (block 0,0).
            pl.BlockSpec((tb, D_in), lambda i: (i, 0), memory_space=vmem),
            pl.BlockSpec((D_in, H), lambda i: (0, 0), memory_space=vmem),
            pl.BlockSpec((1, H), lambda i: (0, 0), memory_space=vmem),
            pl.BlockSpec((H, L), lambda i: (0, 0), memory_space=vmem),
            pl.BlockSpec((1, L), lambda i: (0, 0), memory_space=vmem),
        ],
        out_specs=pl.BlockSpec((tb, L), lambda i: (i, 0), memory_space=vmem),
        compiler_params=pltpu.CompilerParams(
            # Batch tiles are independent -> megacore sharding on v7x.
            dimension_semantics=("parallel",),
        ),
        cost_estimate=cost,
    )(x, w1, b1, w2, b2)

    return out[:B] if padded_b != B else out


def reference_forward(x, w1, b1, w2, b2, stream_dtype=None):
    """Pure-JAX reference with the same dtype policy as the kernel."""
    out_dtype = x.dtype
    if stream_dtype is not None:
        x = x.astype(stream_dtype)
        w1 = w1.astype(stream_dtype)
        w2 = w2.astype(stream_dtype)
    h = jnp.dot(x, w1, preferred_element_type=jnp.float32) + b1
    h = jnp.maximum(h, 0.0).astype(w2.dtype)
    z = jnp.dot(h, w2, preferred_element_type=jnp.float32) + b2
    return z.astype(out_dtype)


def encode(x, w1, b1, w2, b2, *, min_pallas_batch=256, **kw):
    """Dispatch helper: for tiny batches the pallas_call fixed cost dominates,
    so fall back to plain XLA; use the streaming kernel at realistic batch."""
    if x.shape[0] < min_pallas_batch:
        return reference_forward(x, w1, b1, w2, b2)
    return encoder_forward(x, w1, b1, w2, b2, **kw)


if __name__ == "__main__":
    key = jax.random.PRNGKey(0)
    kx, kw1, kb1, kw2, kb2, kxb = jax.random.split(key, 6)

    # Small shapes consistent with an MLP AE encoder (PyTorch Linear, transposed).
    B, D_in, H, L = 2, 64, 32, 8
    x = jax.random.normal(kx, (B, D_in), dtype=jnp.float32)
    w1 = jax.random.normal(kw1, (D_in, H), dtype=jnp.float32) * 0.1
    b1 = jax.random.normal(kb1, (1, H), dtype=jnp.float32) * 0.1
    w2 = jax.random.normal(kw2, (H, L), dtype=jnp.float32) * 0.1
    b2 = jax.random.normal(kb2, (1, L), dtype=jnp.float32) * 0.1

    # (1) Spec shape (B=2): single full-array block, f32, tight tolerance.
    out = jax.block_until_ready(encoder_forward(x, w1, b1, w2, b2))
    ref = reference_forward(x, w1, b1, w2, b2)
    assert out.shape == (B, L)
    assert jnp.allclose(out, ref, atol=1e-5, rtol=1e-5), "f32 mismatch vs reference"

    # (2) Batched pipelined path: grid over B (with padding), bf16 streaming,
    #     f32 accumulation — exercises the perf-oriented configuration.
    Bb = 1037  # deliberately not a multiple of the tile -> exercises padding
    xb = jax.random.normal(kxb, (Bb, D_in), dtype=jnp.float32)
    out_b = jax.block_until_ready(
        encoder_forward(xb, w1, b1, w2, b2, block_b=512, stream_dtype=jnp.bfloat16))
    ref_b = reference_forward(xb, w1, b1, w2, b2, stream_dtype=jnp.bfloat16)
    assert out_b.shape == (Bb, L)
    assert jnp.allclose(out_b, ref_b, atol=1e-2, rtol=1e-2), "bf16 mismatch vs reference"

    print("KERNEL_OK")
</pallas_src>

<mosaic_0001>
module attributes {stable_mosaic.version = 11 : i64} {
  func.func @_encoder_kernel(%arg0: i32, %arg1: memref<2x64xf32, #tpu.memory_space<vmem>>, %arg2: memref<64x32xf32, #tpu.memory_space<vmem>>, %arg3: memref<1x32xf32, #tpu.memory_space<vmem>>, %arg4: memref<32x8xf32, #tpu.memory_space<vmem>>, %arg5: memref<1x8xf32, #tpu.memory_space<vmem>>, %arg6: memref<2x8xf32, #tpu.memory_space<vmem>>) attributes {dimension_semantics = [#tpu.dimension_semantics<parallel>], iteration_bounds = array<i64: 1>, scalar_prefetch = 0 : i64, scratch_operands = 0 : i64, tpu.core_type = #tpu.core_type<tc>, window_params = [{transform_indices = @transform_0, window_bounds = array<i64: 2, 64>}, {pipeline_mode = #tpu.pipeline_mode<synchronous>, transform_indices = @transform_1, window_bounds = array<i64: 64, 32>}, {pipeline_mode = #tpu.pipeline_mode<synchronous>, transform_indices = @transform_2, window_bounds = array<i64: 1, 32>}, {pipeline_mode = #tpu.pipeline_mode<synchronous>, transform_indices = @transform_3, window_bounds = array<i64: 32, 8>}, {pipeline_mode = #tpu.pipeline_mode<synchronous>, transform_indices = @transform_4, window_bounds = array<i64: 1, 8>}, {transform_indices = @transform_5, window_bounds = array<i64: 2, 8>}]} {
    %c0 = arith.constant 0 : index
    %c0_0 = arith.constant 0 : index
    %0 = vector.load %arg1[%c0, %c0_0] : memref<2x64xf32, #tpu.memory_space<vmem>>, vector<2x64xf32>
    %c0_1 = arith.constant 0 : index
    %c0_2 = arith.constant 0 : index
    %1 = vector.load %arg2[%c0_1, %c0_2] : memref<64x32xf32, #tpu.memory_space<vmem>>, vector<64x32xf32>
    %cst = arith.constant dense<0.000000e+00> : vector<2x32xf32>
    %2 = tpu.matmul %0, %1, %cst {dimension_numbers = #tpu.dot_dimension_numbers<[1], [0], [0], [1], [0, 0, 1, 1], [], []>} : vector<2x64xf32>, vector<64x32xf32>, vector<2x32xf32> -> vector<2x32xf32>
    %c0_3 = arith.constant 0 : index
    %c0_4 = arith.constant 0 : index
    %3 = vector.load %arg3[%c0_3, %c0_4] : memref<1x32xf32, #tpu.memory_space<vmem>>, vector<1x32xf32>
    %4 = vector.broadcast %3 : vector<1x32xf32> to vector<2x32xf32>
    %5 = arith.addf %2, %4 : vector<2x32xf32>
    %cst_5 = arith.constant 0.000000e+00 : f32
    %6 = vector.broadcast %cst_5 : f32 to vector<2x32xf32>
    %7 = arith.maximumf %5, %6 : vector<2x32xf32>
    %c0_6 = arith.constant 0 : index
    %c0_7 = arith.constant 0 : index
    %8 = vector.load %arg4[%c0_6, %c0_7] : memref<32x8xf32, #tpu.memory_space<vmem>>, vector<32x8xf32>
    %cst_8 = arith.constant dense<0.000000e+00> : vector<2x8xf32>
    %9 = tpu.matmul %7, %8, %cst_8 {dimension_numbers = #tpu.dot_dimension_numbers<[1], [0], [0], [1], [0, 0, 1, 1], [], []>} : vector<2x32xf32>, vector<32x8xf32>, vector<2x8xf32> -> vector<2x8xf32>
    %c0_9 = arith.constant 0 : index
    %c0_10 = arith.constant 0 : index
    %10 = vector.load %arg5[%c0_9, %c0_10] : memref<1x8xf32, #tpu.memory_space<vmem>>, vector<1x8xf32>
    %11 = vector.broadcast %10 : vector<1x8xf32> to vector<2x8xf32>
    %12 = arith.addf %9, %11 : vector<2x8xf32>
    %c0_11 = arith.constant 0 : index
    %c0_12 = arith.constant 0 : index
    %13 = vector.load %arg6[%c0_11, %c0_12] : memref<2x8xf32, #tpu.memory_space<vmem>>, vector<2x8xf32>
    tpu.vector_store %arg6[%c0_11, %c0_12], %12 {strides = array<i32>} : memref<2x8xf32, #tpu.memory_space<vmem>>, vector<2x8xf32>,
    return
  }
  func.func @transform_0(%arg0: i32) -> (i32, i32) {
    %c0_i32 = arith.constant 0 : i32
    %c0_i32_0 = arith.constant 0 : i32
    return %arg0, %c0_i32 : i32, i32
  }
  func.func @transform_1(%arg0: i32) -> (i32, i32) {
    %c0_i32 = arith.constant 0 : i32
    %c0_i32_0 = arith.constant 0 : i32
    %c0_i32_1 = arith.constant 0 : i32
    return %c0_i32, %c0_i32_0 : i32, i32
  }
  func.func @transform_2(%arg0: i32) -> (i32, i32) {
    %c0_i32 = arith.constant 0 : i32
    %c0_i32_0 = arith.constant 0 : i32
    %c0_i32_1 = arith.constant 0 : i32
    return %c0_i32, %c0_i32_0 : i32, i32
  }
  func.func @transform_3(%arg0: i32) -> (i32, i32) {
    %c0_i32 = arith.constant 0 : i32
    %c0_i32_0 = arith.constant 0 : i32
    %c0_i32_1 = arith.constant 0 : i32
    return %c0_i32, %c0_i32_0 : i32, i32
  }
  func.func @transform_4(%arg0: i32) -> (i32, i32) {
    %c0_i32 = arith.constant 0 : i32
    %c0_i32_0 = arith.constant 0 : i32
    %c0_i32_1 = arith.constant 0 : i32
    return %c0_i32, %c0_i32_0 : i32, i32
  }
  func.func @transform_5(%arg0: i32) -> (i32, i32) {
    %c0_i32 = arith.constant 0 : i32
    %c0_i32_0 = arith.constant 0 : i32
    return %arg0, %c0_i32 : i32, i32
  }
}

</mosaic_0001>

<llo_original>
// kernel: tpu_custom_call.1
$region0: #{tpu_custom_call.1}
  #allocation0 [shape = 'u32[]', space=smem, size = 0x4, offset = 0x4, fixed_abs, tag = 'smem constant byte address 0x4 - core index']
  #allocation1 [shape = 'u32[144,128]{1,0:T(1,128)}', space=vmem, size = 0x12000, scoped, tag = 'internal scratch']
  %s0 = inlined_call_operand.vmem [shape: f32[2,64], index: 0, kind: input, shape index: {}]
  %s1 = inlined_call_operand.vmem [shape: f32[64,32], index: 1, kind: input, shape index: {}]
  %s2 = inlined_call_operand.vmem [shape: f32[1,32], index: 2, kind: input, shape index: {}]
  %s3 = inlined_call_operand.vmem [shape: f32[32,8], index: 3, kind: input, shape index: {}]
  %s4 = inlined_call_operand.vmem [shape: f32[1,8], index: 4, kind: input, shape index: {}]
  %s5 = inlined_call_operand.hbm [shape: f32[2,8], index: 5, kind: output, shape index: {}]
  %s6 = sld [smem:[#allocation0]]
  $region30: #{tpu_custom_call.1} parent=0
    _
  %s8 = ssub.s32 1, %s6
  %s9 = scalar_select 0, %s8, %s6
  $region1: #{tpu_custom_call.1} parent=0
    #allocation2 [shape = 'u8[1024]{0}', space=vmem, size = 0x400, scoped, tag = 'output window, operand 0, single buffered']
    #allocation3 [shape = 's32[1]{0}', space=sflag, size = 0x4, scoped, tag = 'scoped memory for tpu_custom_call.1']
    %10 = vsyncpa [#allocation3], 0
    // Predicated region
    $region2: #{tpu_custom_call.1} parent=1 // pred_check
      _
    $region3: #{tpu_custom_call.1} parent=1 // pred_check_branch
      %12 = sbr.rel (0) target = $region5
    $region4: #{tpu_custom_call.1} parent=1 // pred_region
      _
    $region5: #{tpu_custom_call.1} parent=1 // pred_fallthru
      _
    // Predicated region
    $region6: #{tpu_custom_call.1} parent=1 // pred_check
      _
    $region7: #{tpu_custom_call.1} parent=1 // pred_check_branch
      %14 = sbr.rel (0) target = $region9
    $region8: #{tpu_custom_call.1} parent=1 // pred_region
      _
    $region9: #{tpu_custom_call.1} parent=1 // pred_fallthru
      _
    // Predicated region
    $region10: #{tpu_custom_call.1} parent=1 // pred_check
      _
    $region11: #{tpu_custom_call.1} parent=1 // pred_check_branch
      %16 = sbr.rel (0) target = $region13
    $region12: #{tpu_custom_call.1} parent=1 // pred_region
      _
    $region13: #{tpu_custom_call.1} parent=1 // pred_fallthru
      _
    // Predicated region
    $region14: #{tpu_custom_call.1} parent=1 // pred_check
      _
    $region15: #{tpu_custom_call.1} parent=1 // pred_check_branch
      %18 = sbr.rel (0) target = $region17
    $region16: #{tpu_custom_call.1} parent=1 // pred_region
      _
    $region17: #{tpu_custom_call.1} parent=1 // pred_fallthru
      _
    // Predicated region
    $region18: #{tpu_custom_call.1} parent=1 // pred_check
      _
    $region19: #{tpu_custom_call.1} parent=1 // pred_check_branch
      %20 = sbr.rel (0) target = $region21
    $region20: #{tpu_custom_call.1} parent=1 // pred_region
      _
    $region21: #{tpu_custom_call.1} parent=1 // pred_fallthru
      _
    %v21 = vld [vmem:[%s0] sm:$0x3]
    %v22 = vld [vmem:[%s1] sm:$0xff]
    %v23 = vld [vmem:[%s1 + $0x8] sm:$0xff]
    %v24 = vld [vmem:[%s1 + $0x10] sm:$0xff]
    %v25 = vld [vmem:[%s1 + $0x18] sm:$0xff]
    %v26 = vld [vmem:[%s1 + $0x20] sm:$0xff]
    %v27 = vld [vmem:[%s1 + $0x28] sm:$0xff]
    %v28 = vld [vmem:[%s1 + $0x30] sm:$0xff]
    %v29 = vld [vmem:[%s1 + $0x38] sm:$0xff]
    %v30 = vld [vmem:[%s2] sm:$0x1]
    %v32 = vlaneseq
    %v33 = vshrl.u32 %v32, 7
    %v34 = vsub.s32 0, %v33
    %v35 = vrot.slane %v30, %v34
    %vm37 = vcmask 523264
    %v39 = vsel %vm37, %v21, 0
    %41 = vmatprep.subr.mxu0 0.0
    %42 = vmatpush1.msra.mxu0 %v22
    %43 = vmatprep.subr.mxu0 0.0
    %44 = vmatpush1.msra.mxu0 %v23
    %45 = vmatprep.subr.mxu0 0.0
    %46 = vmatpush1.msra.mxu0 %v24
    %47 = vmatprep.subr.mxu0 0.0
    %48 = vmatpush1.msra.mxu0 %v25
    %49 = vmatprep.subr.mxu0 0.0
    %50 = vmatpush1.msra.mxu0 %v26
    %51 = vmatprep.subr.mxu0 0.0
    %52 = vmatpush1.msra.mxu0 %v27
    %53 = vmatprep.subr.mxu0 0.0
    %54 = vmatpush1.msra.mxu0 %v28
    %55 = vmatprep.subr.mxu0 0.0
    %56 = vmatpush1.msra.mxu0 %v29
    %57 = vmatprep.subr.mxu0 0.0
    %58 = vmatpush1.msra.mxu0 0.0
    %59 = vmatprep.subr.mxu0 0.0
    %60 = vmatpush1.msra.mxu0 0.0
    %61 = vmatprep.subr.mxu0 0.0
    %62 = vmatpush1.msra.mxu0 0.0
    %63 = vmatprep.subr.mxu0 0.0
    %64 = vmatpush1.msra.mxu0 0.0
    %65 = vmatprep.subr.mxu0 0.0
    %66 = vmatpush1.msra.mxu0 0.0
    %67 = vmatprep.subr.mxu0 0.0
    %68 = vmatpush1.msra.mxu0 0.0
    %69 = vmatprep.subr.mxu0 0.0
    %70 = vmatpush1.msra.mxu0 0.0
    %71 = vmatprep.subr.mxu0 0.0
    %72 = vmatpush1.msra.mxu0 0.0
    %73 = vmatprep.subr.mxu0 0.0
    %74 = vmatpush1.msra.mxu0 0.0
    %75 = vmatprep.subr.mxu0 0.0
    %76 = vmatpush1.msra.mxu0 0.0
    %77 = vmatprep.subr.mxu0 0.0
    %78 = vmatpush1.msra.mxu0 0.0
    %79 = vmatprep.subr.mxu0 0.0
    %80 = vmatpush1.msra.mxu0 0.0
    %81 = vmatprep.subr.mxu0 0.0
    %82 = vmatpush1.msra.mxu0 0.0
    %83 = vmatprep.subr.mxu0 0.0
    %84 = vmatpush1.msra.mxu0 0.0
    %85 = vmatprep.subr.mxu0 0.0
    %86 = vmatpush1.msra.mxu0 0.0
    %87 = vmatprep.subr.mxu0 0.0
    %88 = vmatpush1.msra.mxu0 0.0
    %89 = vmatprep.subr.mxu0 0.0
    %90 = vmatpush1.msra.mxu0 0.0
    %91 = vmatprep.subr.mxu0 0.0
    %92 = vmatpush1.msra.mxu0 0.0
    %93 = vmatprep.subr.mxu0 0.0
    %94 = vmatpush1.msra.mxu0 0.0
    %95 = vmatprep.subr.mxu0 0.0
    %96 = vmatpush1.msra.mxu0 0.0
    %97 = vmatprep.subr.mxu0 0.0
    %98 = vmatpush1.msra.mxu0 0.0
    %99 = vmatprep.subr.mxu0 0.0
    %100 = vmatpush1.msra.mxu0 0.0
    %101 = vmatprep.subr.mxu0 0.0
    %102 = vmatpush1.msra.mxu0 0.0
    %103 = vmatprep.subr.mxu0 0.0
    %104 = vmatpush1.msra.mxu0 0.0
    %105 = vmatprep.mubr.f32.mxu0 0.0
    %106 = vmatmul.mubr.f32.gmra.mrb[0].mxu0 %v39
    %v107 = vpop.f32.mrb[0].mxu0
    %v108 = vadd.f32 %v35, %v107
    %v109 = vpop.f32.mrb[0].mxu0
    %110 = vdwg.mxu0
    %v111 = vmax.f32 %v108, 0.0
    %v112 = vld [vmem:[%s3] sm:$0xff]
    %v113 = vld [vmem:[%s3 + $0x8] sm:$0xff]
    %v114 = vld [vmem:[%s3 + $0x10] sm:$0xff]
    %v115 = vld [vmem:[%s3 + $0x18] sm:$0xff]
    %v116 = vld [vmem:[%s4] sm:$0x1]
    %v118 = vlaneseq
    %v119 = vshrl.u32 %v118, 7
    %v120 = vsub.s32 0, %v119
    %v121 = vrot.slane %v116, %v120
    %vm123 = vcmask 261120
    %v125 = vsel %vm123, %v111, 0
    %127 = vmatprep.subr.mxu0 0.0
    %128 = vmatpush1.msra.mxu0 %v112
    %129 = vmatprep.subr.mxu0 0.0
    %130 = vmatpush1.msra.mxu0 %v113
    %131 = vmatprep.subr.mxu0 0.0
    %132 = vmatpush1.msra.mxu0 %v114
    %133 = vmatprep.subr.mxu0 0.0
    %134 = vmatpush1.msra.mxu0 %v115
    %135 = vmatprep.subr.mxu0 0.0
    %136 = vmatpush1.msra.mxu0 0.0
    %137 = vmatprep.subr.mxu0 0.0
    %138 = vmatpush1.msra.mxu0 0.0
    %139 = vmatprep.subr.mxu0 0.0
    %140 = vmatpush1.msra.mxu0 0.0
    %141 = vmatprep.subr.mxu0 0.0
    %142 = vmatpush1.msra.mxu0 0.0
    %143 = vmatprep.subr.mxu0 0.0
    %144 = vmatpush1.msra.mxu0 0.0
    %145 = vmatprep.subr.mxu0 0.0
    %146 = vmatpush1.msra.mxu0 0.0
    %147 = vmatprep.subr.mxu0 0.0
    %148 = vmatpush1.msra.mxu0 0.0
    %149 = vmatprep.subr.mxu0 0.0
    %150 = vmatpush1.msra.mxu0 0.0
    %151 = vmatprep.subr.mxu0 0.0
    %152 = vmatpush1.msra.mxu0 0.0
    %153 = vmatprep.subr.mxu0 0.0
    %154 = vmatpush1.msra.mxu0 0.0
    %155 = vmatprep.subr.mxu0 0.0
    %156 = vmatpush1.msra.mxu0 0.0
    %157 = vmatprep.subr.mxu0 0.0
    %158 = vmatpush1.msra.mxu0 0.0
    %159 = vmatprep.subr.mxu0 0.0
    %160 = vmatpush1.msra.mxu0 0.0
    %161 = vmatprep.subr.mxu0 0.0
    %162 = vmatpush1.msra.mxu0 0.0
    %163 = vmatprep.subr.mxu0 0.0
    %164 = vmatpush1.msra.mxu0 0.0
    %165 = vmatprep.subr.mxu0 0.0
    %166 = vmatpush1.msra.mxu0 0.0
    %167 = vmatprep.subr.mxu0 0.0
    %168 = vmatpush1.msra.mxu0 0.0
    %169 = vmatprep.subr.mxu0 0.0
    %170 = vmatpush1.msra.mxu0 0.0
    %171 = vmatprep.subr.mxu0 0.0
    %172 = vmatpush1.msra.mxu0 0.0
    %173 = vmatprep.subr.mxu0 0.0
    %174 = vmatpush1.msra.mxu0 0.0
    %175 = vmatprep.subr.mxu0 0.0
    %176 = vmatpush1.msra.mxu0 0.0
    %177 = vmatprep.subr.mxu0 0.0
    %178 = vmatpush1.msra.mxu0 0.0
    %179 = vmatprep.subr.mxu0 0.0
    %180 = vmatpush1.msra.mxu0 0.0
    %181 = vmatprep.subr.mxu0 0.0
    %182 = vmatpush1.msra.mxu0 0.0
    %183 = vmatprep.subr.mxu0 0.0
    %184 = vmatpush1.msra.mxu0 0.0
    %185 = vmatprep.subr.mxu0 0.0
    %186 = vmatpush1.msra.mxu0 0.0
    %187 = vmatprep.subr.mxu0 0.0
    %188 = vmatpush1.msra.mxu0 0.0
    %189 = vmatprep.subr.mxu0 0.0
    %190 = vmatpush1.msra.mxu0 0.0
    %191 = vmatprep.mubr.f32.mxu0 0.0
    %192 = vmatmul.mubr.f32.gmra.mrb[0].mxu0 %v125
    %v193 = vpop.f32.mrb[0].mxu0
    %v194 = vadd.f32 %v121, %v193
    %v195 = vpop.f32.mrb[0].mxu0
    %196 = vdwg.mxu0
    %vm197 = vcmask 58368
    %198 = vst.msk [vmem:[#allocation2] sm:$0x3] %vm197, %v194
    // Predicated region
    $region22: #{tpu_custom_call.1} parent=1 // pred_check
      _
    $region23: #{tpu_custom_call.1} parent=1 // pred_check_branch
      %200 = sbr.rel (0) target = $region25
    $region24: #{tpu_custom_call.1} parent=1 // pred_region
      %s202 = ssub.s32 32, 32
      %203 = vsyncadd [#allocation3], %s202
      %s205 = sshll.u32 [#allocation2], 4
      %s206 = int_to_ptr.vmem [resolvable:$true] %s205
      %208 = dma.vmem_to_hbm [thread:$0]  %s206, 32, %s5, [#allocation3]
    $region25: #{tpu_custom_call.1} parent=1 // pred_fallthru
      _
    // Predicated region
    $region26: #{tpu_custom_call.1} parent=1 // pred_check
      _
    $region27: #{tpu_custom_call.1} parent=1 // pred_check_branch
      %210 = sbr.rel (0) target = $region29
    $region28: #{tpu_custom_call.1} parent=1 // pred_region
      %211 = dma.done [#allocation3], 32
    $region29: #{tpu_custom_call.1} parent=1 // pred_fallthru
      _
    %212 = vsyncpa [#allocation3], 1

</llo_original>
